<compile_context>
chip_gen: v6e
topology: v6e:2x2x1
jax: 0.10.0
libtpu: 0.0.40
codegen_flags: <defaults>
</compile_context>

<pallas_src>
import math

import jax
import jax.numpy as jnp
from jax.experimental import pallas as pl
from jax.experimental.pallas import tpu as pltpu

LANES = 128
SUBLANES = 8
MAX_TILE_ROWS = 1024     # 1024x128 f32 = 512 KiB per pipeline buffer
NUM_CORES = 2            # leading "parallel" grid axis; no-op on 1-TC chips


def _loss_tile(p, t, *, alpha, gamma, beta):
    """Element-wise balanced-L1 loss on an f32 tile (constants folded in Python)."""
    b = math.e ** (gamma / alpha) - 1.0
    diff = jnp.abs(p - t)
    bd = b * diff                                   # hoisted common subexpression
    small = (alpha / b) * (bd + 1.0) * jnp.log1p(bd * (1.0 / beta)) - alpha * diff
    large = gamma * diff + (gamma / b - alpha * beta)
    return jnp.where(diff < beta, small, large)


def _make_reduce_kernel(alpha, gamma, beta, *, tile_rows, tiles_per_core,
                        full_tiles, n_valid):
    groups = tile_rows // SUBLANES

    def kernel(pred_ref, tgt_ref, out_ref, acc_ref):
        c = pl.program_id(0)
        i = pl.program_id(1)
        t_idx = c * tiles_per_core + i              # global row-tile index

        @pl.when(i == 0)
        def _():
            acc_ref[...] = jnp.zeros_like(acc_ref)

        p = pred_ref[...].astype(jnp.float32)       # cast in-register, not in HBM
        t = tgt_ref[...].astype(jnp.float32)
        loss = _loss_tile(p, t, alpha=alpha, gamma=gamma, beta=beta)

        # Interior tiles: plain VPU accumulate into the vreg-shaped scratch.
        @pl.when(t_idx < full_tiles)
        def _():
            acc_ref[...] += loss.reshape(groups, SUBLANES, LANES).sum(axis=0)

        # Edge / out-of-range tiles: mask by global element index.  (The input
        # block index was clamped in the index_map, so any stray data read by
        # out-of-range programs is simply masked to zero here.)
        @pl.when(t_idx >= full_tiles)
        def _():
            ridx = jax.lax.broadcasted_iota(jnp.int32, (tile_rows, LANES), 0)
            lidx = jax.lax.broadcasted_iota(jnp.int32, (tile_rows, LANES), 1)
            gidx = t_idx * (tile_rows * LANES) + ridx * LANES + lidx
            masked = jnp.where(gidx < n_valid, loss, 0.0)
            acc_ref[...] += masked.reshape(groups, SUBLANES, LANES).sum(axis=0)

        @pl.when(i == pl.num_programs(1) - 1)
        def _():
            out_ref[...] = acc_ref[...]

    return kernel


def _make_elementwise_kernel(alpha, gamma, beta):
    def kernel(pred_ref, tgt_ref, out_ref):
        p = pred_ref[...].astype(jnp.float32)
        t = tgt_ref[...].astype(jnp.float32)
        loss = _loss_tile(p, t, alpha=alpha, gamma=gamma, beta=beta)
        out_ref[...] = loss.astype(out_ref.dtype)
    return kernel


def _as_lane_slab(x):
    """Flatten x row-major into a (rows, 128) slab in its original dtype."""
    n = x.size
    flat = jnp.ravel(x)
    rem = (-n) % LANES
    if rem:
        # TODO(synk): only triggers when numel % 128 != 0; the small pad still
        # costs one extra HBM copy but is unavoidable for the 2-D reshape.
        flat = jnp.pad(flat, (0, rem))
    rows = (n + rem) // LANES
    return flat.reshape(rows, LANES), rows


def balanced_l1_loss_pallas(pred, target, *, alpha=0.5, gamma=1.5, beta=1.0,
                            reduction="mean", loss_weight=1.0):
    assert beta > 0
    assert pred.shape == target.shape and pred.size > 0
    assert reduction in {"none", "sum", "mean"}

    n = pred.size
    pred2d, rows = _as_lane_slab(pred)
    tgt2d, _ = _as_lane_slab(target)

    # Tile rows: as large as practical (amortize per-step overhead) but no
    # larger than the 8-rounded problem size.
    tile_rows = min(MAX_TILE_ROWS, ((rows + SUBLANES - 1) // SUBLANES) * SUBLANES)
    tiles_total = pl.cdiv(rows, tile_rows)

    if reduction == "none":
        out2d = pl.pallas_call(
            _make_elementwise_kernel(alpha, gamma, beta),
            out_shape=jax.ShapeDtypeStruct((rows, LANES), pred.dtype),
            grid_spec=pltpu.PrefetchScalarGridSpec(
                num_scalar_prefetch=0,
                grid=(tiles_total,),
                in_specs=[pl.BlockSpec((tile_rows, LANES), lambda i: (i, 0)),
                          pl.BlockSpec((tile_rows, LANES), lambda i: (i, 0))],
                out_specs=pl.BlockSpec((tile_rows, LANES), lambda i: (i, 0)),
            ),
            compiler_params=pltpu.CompilerParams(
                dimension_semantics=("parallel",)),
        )(pred2d, tgt2d)
        loss = out2d.reshape(-1)[:n].reshape(pred.shape)
        return loss * jnp.asarray(loss_weight, loss.dtype)

    tiles_per_core = pl.cdiv(tiles_total, NUM_CORES)
    full_tiles = n // (tile_rows * LANES)   # tiles needing no tail mask

    def in_map(c, i):
        t = c * tiles_per_core + i
        return (jnp.minimum(t, tiles_total - 1), 0)   # clamp OOB programs

    partials = pl.pallas_call(
        _make_reduce_kernel(alpha, gamma, beta, tile_rows=tile_rows,
                            tiles_per_core=tiles_per_core,
                            full_tiles=full_tiles, n_valid=n),
        out_shape=jax.ShapeDtypeStruct((NUM_CORES * SUBLANES, LANES), jnp.float32),
        grid_spec=pltpu.PrefetchScalarGridSpec(
            num_scalar_prefetch=0,
            grid=(NUM_CORES, tiles_per_core),
            in_specs=[pl.BlockSpec((tile_rows, LANES), in_map),
                      pl.BlockSpec((tile_rows, LANES), in_map)],
            out_specs=pl.BlockSpec((SUBLANES, LANES), lambda c, i: (c, 0)),
            scratch_shapes=[pltpu.VMEM((SUBLANES, LANES), jnp.float32)],
        ),
        compiler_params=pltpu.CompilerParams(
            dimension_semantics=("parallel", "arbitrary")),
    )(pred2d, tgt2d)

    total = jnp.sum(partials)
    if reduction == "mean":
        total = total / jnp.float32(n)
    return jnp.float32(loss_weight) * total


class BalancedL1LossPallas:
    def __init__(self, alpha=0.5, gamma=1.5, beta=1.0, reduction="mean",
                 loss_weight=1.0):
        assert reduction in {"none", "sum", "mean"}
        self.alpha = alpha
        self.gamma = gamma
        self.beta = beta
        self.reduction = reduction
        self.loss_weight = loss_weight

    def __call__(self, pred, target):
        return balanced_l1_loss_pallas(
            pred, target, alpha=self.alpha, gamma=self.gamma, beta=self.beta,
            reduction=self.reduction, loss_weight=self.loss_weight)


def _reference(pred, target, alpha=0.5, gamma=1.5, beta=1.0,
               reduction="mean", loss_weight=1.0):
    diff = jnp.abs(pred.astype(jnp.float32) - target.astype(jnp.float32))
    b = math.e ** (gamma / alpha) - 1.0
    loss = jnp.where(
        diff < beta,
        alpha / b * (b * diff + 1.0) * jnp.log(b * diff / beta + 1.0) - alpha * diff,
        gamma * diff + gamma / b - alpha * beta,
    )
    if reduction == "mean":
        loss = jnp.mean(loss)
    elif reduction == "sum":
        loss = jnp.sum(loss)
    return loss_weight * loss


if __name__ == "__main__":
    key = jax.random.PRNGKey(0)
    k1, k2 = jax.random.split(key)
    # NCHW-shaped inputs, consistent with a bbox-regression-like tensor.
    pred = jax.random.normal(k1, (2, 4, 16, 16), dtype=jnp.float32) * 2.0
    target = jax.random.normal(k2, (2, 4, 16, 16), dtype=jnp.float32) * 2.0

    # mean (default module config)
    out_mean = jax.block_until_ready(BalancedL1LossPallas()(pred, target))
    ref_mean = jax.block_until_ready(_reference(pred, target, reduction="mean"))
    assert jnp.allclose(out_mean, ref_mean, rtol=1e-5, atol=1e-5), (out_mean, ref_mean)

    # sum
    out_sum = jax.block_until_ready(
        BalancedL1LossPallas(reduction="sum")(pred, target))
    ref_sum = _reference(pred, target, reduction="sum")
    assert jnp.allclose(out_sum, ref_sum, rtol=1e-5, atol=1e-3), (out_sum, ref_sum)

    # none (elementwise)
    out_none = jax.block_until_ready(
        BalancedL1LossPallas(reduction="none")(pred, target))
    ref_none = _reference(pred, target, reduction="none")
    assert out_none.shape == pred.shape
    assert jnp.allclose(out_none, ref_none, rtol=1e-5, atol=1e-5)

    print("KERNEL_OK")
</pallas_src>

<mosaic_0001>
module attributes {stable_mosaic.version = 11 : i64} {
  func.func @kernel(%arg0: i32, %arg1: i32, %arg2: memref<16x128xf32, #tpu.memory_space<vmem>>, %arg3: memref<16x128xf32, #tpu.memory_space<vmem>>, %arg4: memref<8x128xf32, #tpu.memory_space<vmem>>, %arg5: memref<8x128xf32, #tpu.memory_space<vmem>>) attributes {dimension_semantics = [#tpu.dimension_semantics<parallel>, #tpu.dimension_semantics<arbitrary>], iteration_bounds = array<i64: 2, 1>, scalar_prefetch = 0 : i64, scratch_operands = 1 : i64, tpu.core_type = #tpu.core_type<tc>, window_params = [{transform_indices = @transform_0, window_bounds = array<i64: 16, 128>}, {transform_indices = @transform_1, window_bounds = array<i64: 16, 128>}, {transform_indices = @transform_2, window_bounds = array<i64: 8, 128>}]} {
    %c1_i32 = arith.constant 1 : i32
    %0 = arith.muli %arg0, %c1_i32 : i32
    %1 = arith.addi %0, %arg1 : i32
    %c0_i32 = arith.constant 0 : i32
    %2 = arith.cmpi eq, %arg1, %c0_i32 : i32
    %3 = arith.extui %2 : i1 to i32
    %c0_i32_0 = arith.constant 0 : i32
    %4 = arith.cmpi ne, %3, %c0_i32_0 : i32
    scf.if %4 {
      %cst_17 = arith.constant 0.000000e+00 : f32
      %38 = vector.broadcast %cst_17 : f32 to vector<8x128xf32>
      %c0_18 = arith.constant 0 : index
      %c0_19 = arith.constant 0 : index
      %39 = vector.load %arg5[%c0_18, %c0_19] : memref<8x128xf32, #tpu.memory_space<vmem>>, vector<8x128xf32>
      tpu.vector_store %arg5[%c0_18, %c0_19], %38 {strides = array<i32>} : memref<8x128xf32, #tpu.memory_space<vmem>>, vector<8x128xf32>,
    } else {
    }
    %c0 = arith.constant 0 : index
    %c0_1 = arith.constant 0 : index
    %5 = vector.load %arg2[%c0, %c0_1] : memref<16x128xf32, #tpu.memory_space<vmem>>, vector<16x128xf32>
    %c0_2 = arith.constant 0 : index
    %c0_3 = arith.constant 0 : index
    %6 = vector.load %arg3[%c0_2, %c0_3] : memref<16x128xf32, #tpu.memory_space<vmem>>, vector<16x128xf32>
    %7 = arith.subf %5, %6 : vector<16x128xf32>
    %8 = math.absf %7 : vector<16x128xf32>
    %cst = arith.constant 19.085537 : f32
    %9 = vector.broadcast %cst : f32 to vector<16x128xf32>
    %10 = arith.mulf %9, %8 : vector<16x128xf32>
    %cst_4 = arith.constant 1.000000e+00 : f32
    %11 = vector.broadcast %cst_4 : f32 to vector<16x128xf32>
    %12 = arith.addf %10, %11 : vector<16x128xf32>
    %cst_5 = arith.constant 0.0261978488 : f32
    %13 = vector.broadcast %cst_5 : f32 to vector<16x128xf32>
    %14 = arith.mulf %13, %12 : vector<16x128xf32>
    %cst_6 = arith.constant 1.000000e+00 : f32
    %15 = vector.broadcast %cst_6 : f32 to vector<16x128xf32>
    %16 = arith.mulf %10, %15 : vector<16x128xf32>
    %17 = math.log1p %16 : vector<16x128xf32>
    %18 = arith.mulf %14, %17 : vector<16x128xf32>
    %cst_7 = arith.constant 5.000000e-01 : f32
    %19 = vector.broadcast %cst_7 : f32 to vector<16x128xf32>
    %20 = arith.mulf %19, %8 : vector<16x128xf32>
    %21 = arith.subf %18, %20 : vector<16x128xf32>
    %cst_8 = arith.constant 1.500000e+00 : f32
    %22 = vector.broadcast %cst_8 : f32 to vector<16x128xf32>
    %23 = arith.mulf %22, %8 : vector<16x128xf32>
    %cst_9 = arith.constant -0.421406448 : f32
    %24 = vector.broadcast %cst_9 : f32 to vector<16x128xf32>
    %25 = arith.addf %23, %24 : vector<16x128xf32>
    %cst_10 = arith.constant 1.000000e+00 : f32
    %26 = vector.broadcast %cst_10 : f32 to vector<16x128xf32>
    %27 = arith.cmpf olt, %8, %26 : vector<16x128xf32>
    %28 = arith.select %27, %21, %25 : vector<16x128xi1>, vector<16x128xf32>
    %c1_i32_11 = arith.constant 1 : i32
    %29 = arith.cmpi slt, %1, %c1_i32_11 : i32
    %30 = arith.extui %29 : i1 to i32
    %c0_i32_12 = arith.constant 0 : i32
    %31 = arith.cmpi ne, %30, %c0_i32_12 : i32
    scf.if %31 {
      %c0_17 = arith.constant 0 : index
      %c0_18 = arith.constant 0 : index
      %38 = vector.load %arg5[%c0_17, %c0_18] : memref<8x128xf32, #tpu.memory_space<vmem>>, vector<8x128xf32>
      %39 = vector.shape_cast %28 : vector<16x128xf32> to vector<2x8x128xf32>
      %cst_19 = arith.constant dense<0.000000e+00> : vector<8x128xf32>
      %40 = vector.multi_reduction <add>, %39, %cst_19 [0] : vector<2x8x128xf32> to vector<8x128xf32>
      %41 = arith.addf %38, %40 : vector<8x128xf32>
      %c0_20 = arith.constant 0 : index
      %c0_21 = arith.constant 0 : index
      %42 = vector.load %arg5[%c0_20, %c0_21] : memref<8x128xf32, #tpu.memory_space<vmem>>, vector<8x128xf32>
      tpu.vector_store %arg5[%c0_20, %c0_21], %41 {strides = array<i32>} : memref<8x128xf32, #tpu.memory_space<vmem>>, vector<8x128xf32>,
    } else {
    }
    %c1_i32_13 = arith.constant 1 : i32
    %32 = arith.cmpi sge, %1, %c1_i32_13 : i32
    %33 = arith.extui %32 : i1 to i32
    %c0_i32_14 = arith.constant 0 : i32
    %34 = arith.cmpi ne, %33, %c0_i32_14 : i32
    scf.if %34 {
      %38 = tpu.iota {dimensions = array<i32: 0>} : vector<16x128xi32>
      %39 = tpu.iota {dimensions = array<i32: 1>} : vector<16x128xi32>
      %c2048_i32 = arith.constant 2048 : i32
      %40 = arith.muli %1, %c2048_i32 : i32
      %c128_i32 = arith.constant 128 : i32
      %41 = vector.broadcast %c128_i32 : i32 to vector<16x128xi32>
      %42 = arith.muli %38, %41 : vector<16x128xi32>
      %43 = vector.broadcast %40 : i32 to vector<16x128xi32>
      %44 = arith.addi %43, %42 : vector<16x128xi32>
      %45 = arith.addi %44, %39 : vector<16x128xi32>
      %c2048_i32_17 = arith.constant 2048 : i32
      %46 = vector.broadcast %c2048_i32_17 : i32 to vector<16x128xi32>
      %47 = arith.cmpi slt, %45, %46 : vector<16x128xi32>
      %cst_18 = arith.constant 0.000000e+00 : f32
      %48 = vector.broadcast %cst_18 : f32 to vector<16x128xf32>
      %49 = arith.select %47, %28, %48 : vector<16x128xi1>, vector<16x128xf32>
      %c0_19 = arith.constant 0 : index
      %c0_20 = arith.constant 0 : index
      %50 = vector.load %arg5[%c0_19, %c0_20] : memref<8x128xf32, #tpu.memory_space<vmem>>, vector<8x128xf32>
      %51 = vector.shape_cast %49 : vector<16x128xf32> to vector<2x8x128xf32>
      %cst_21 = arith.constant dense<0.000000e+00> : vector<8x128xf32>
      %52 = vector.multi_reduction <add>, %51, %cst_21 [0] : vector<2x8x128xf32> to vector<8x128xf32>
      %53 = arith.addf %50, %52 : vector<8x128xf32>
      %c0_22 = arith.constant 0 : index
      %c0_23 = arith.constant 0 : index
      %54 = vector.load %arg5[%c0_22, %c0_23] : memref<8x128xf32, #tpu.memory_space<vmem>>, vector<8x128xf32>
      tpu.vector_store %arg5[%c0_22, %c0_23], %53 {strides = array<i32>} : memref<8x128xf32, #tpu.memory_space<vmem>>, vector<8x128xf32>,
    } else {
    }
    %c0_i32_15 = arith.constant 0 : i32
    %35 = arith.cmpi eq, %arg1, %c0_i32_15 : i32
    %36 = arith.extui %35 : i1 to i32
    %c0_i32_16 = arith.constant 0 : i32
    %37 = arith.cmpi ne, %36, %c0_i32_16 : i32
    scf.if %37 {
      %c0_17 = arith.constant 0 : index
      %c0_18 = arith.constant 0 : index
      %38 = vector.load %arg5[%c0_17, %c0_18] : memref<8x128xf32, #tpu.memory_space<vmem>>, vector<8x128xf32>
      %c0_19 = arith.constant 0 : index
      %c0_20 = arith.constant 0 : index
      %39 = vector.load %arg4[%c0_19, %c0_20] : memref<8x128xf32, #tpu.memory_space<vmem>>, vector<8x128xf32>
      tpu.vector_store %arg4[%c0_19, %c0_20], %38 {strides = array<i32>} : memref<8x128xf32, #tpu.memory_space<vmem>>, vector<8x128xf32>,
    } else {
    }
    return
  }
  func.func @transform_0(%arg0: i32, %arg1: i32) -> (i32, i32) {
    %c1_i32 = arith.constant 1 : i32
    %0 = arith.muli %arg0, %c1_i32 : i32
    %1 = arith.addi %0, %arg1 : i32
    %c0_i32 = arith.constant 0 : i32
    %2 = arith.minsi %1, %c0_i32 : i32
    %c0_i32_0 = arith.constant 0 : i32
    %c0_i32_1 = arith.constant 0 : i32
    return %2, %c0_i32_0 : i32, i32
  }
  func.func @transform_1(%arg0: i32, %arg1: i32) -> (i32, i32) {
    %c1_i32 = arith.constant 1 : i32
    %0 = arith.muli %arg0, %c1_i32 : i32
    %1 = arith.addi %0, %arg1 : i32
    %c0_i32 = arith.constant 0 : i32
    %2 = arith.minsi %1, %c0_i32 : i32
    %c0_i32_0 = arith.constant 0 : i32
    %c0_i32_1 = arith.constant 0 : i32
    return %2, %c0_i32_0 : i32, i32
  }
  func.func @transform_2(%arg0: i32, %arg1: i32) -> (i32, i32) {
    %c0_i32 = arith.constant 0 : i32
    %c0_i32_0 = arith.constant 0 : i32
    return %arg0, %c0_i32 : i32, i32
  }
}

</mosaic_0001>

<llo_original>
// kernel: tpu_custom_call.1
$region0: #{tpu_custom_call.1}
  #allocation0 [shape = 'u32[]', space=smem, size = 0x4, offset = 0x4, fixed_abs, tag = 'smem constant byte address 0x4 - core index']
  #allocation1 [shape = 'u32[144,128]{1,0:T(1,128)}', space=vmem, size = 0x12000, scoped, tag = 'internal scratch']
  #allocation2 [shape = 'f32[8,128]{1,0:T(8,128)}', space=vmem, size = 0x1000, scoped, tag = 'scratch operand']
  %s0 = inlined_call_operand.hbm [shape: f32[16,128], index: 0, kind: input, shape index: {}]
  %s1 = inlined_call_operand.hbm [shape: f32[16,128], index: 1, kind: input, shape index: {}]
  %s2 = inlined_call_operand.hbm [shape: f32[16,128], index: 2, kind: output, shape index: {}]
  %s3 = sld [smem:[#allocation0]]
  $region65: #{tpu_custom_call.1} parent=0
    _
  %s5 = ssub.s32 1, %s3
  %s6 = scalar_select 0, %s5, %s3
  $region1: #{tpu_custom_call.1} parent=0
    #allocation3 [shape = 'u8[16384]{0}', space=vmem, size = 0x4000, scoped, tag = 'input window, operand 0']
    #allocation4 [shape = 's32[2]{0}', space=sflag, size = 0x8, scoped, tag = 'scoped memory for tpu_custom_call.1']
    #allocation5 [shape = 's32[2]{0}', space=sflag, size = 0x8, scoped, tag = 'scoped memory for tpu_custom_call.1']
    #allocation6 [shape = 'u8[16384]{0}', space=vmem, size = 0x4000, scoped, tag = 'input window, operand 1']
    #allocation7 [shape = 's32[2]{0}', space=sflag, size = 0x8, scoped, tag = 'scoped memory for tpu_custom_call.1']
    #allocation8 [shape = 'u8[8192]{0}', space=vmem, size = 0x2000, scoped, tag = 'output window, operand 0']
    %7 = vsyncpa [#allocation4], 0
    %s8 = scalar_lea.sflag [#allocation4], 1
    %9 = vsyncpa %s8, 0
    %10 = vsyncpa [#allocation7], 0
    %s11 = scalar_lea.sflag [#allocation7], 1
    %12 = vsyncpa %s11, 0
    %13 = vsyncpa [#allocation5], 0
    %s14 = scalar_lea.sflag [#allocation5], 1
    %15 = vsyncpa %s14, 0
    loop: start=0, step=1, limit=4
    $region2: #{tpu_custom_call.1} parent=1 // loop_pre_header
      _
    $region3: #{tpu_custom_call.1} parent=1 // loop_header
      %s17 = sphi 0, %s21
      %p18 = scmp.ge.s32.totalorder %s17, 4
      %s24 = sphi 0, %s36
      %s25 = sphi 0, %s32
      %s26 = sphi 0, %s24
      %s27 = sphi 0, %s25
      %s28 = sphi 0, %s26
      %s29 = sphi 0, %s27
      %s45 = sphi 0, %s47
      %s48 = sphi 0, %s45
      %s49 = sphi 0, %s48
      %s65 = sphi 0, %s49
      %s77 = sphi 0, %s79
      %s80 = sphi 0, %s77
      %s81 = sphi 0, %s80
      %s97 = sphi 0, %s81
      %s103 = sphi 0, %s105
      %s106 = sphi 0, %s103
      %s107 = sphi 0, %s106
      %s123 = sphi 0, %s107
    $region4: #{tpu_custom_call.1} parent=1 // loop_header_branch
      %20 = sbr.rel (%p18) target = $region8
    $region5: #{tpu_custom_call.1} parent=1 // loop_body
      %s22 = ssub.s32 %s17, 1
      %s23 = ssub.s32 %s17, 2
      %s30 = sadd.s32 1, %s25
      %p31 = scmp.ge.s32.totalorder %s30, 1
      %s32 = scalar_select %p31, 0, %s30
      %s33 = sadd.s32 1, %s24
      %s34 = scalar_select %p31, %s33, %s24
      %p35 = scmp.ge.s32.totalorder %s34, 2
      %s36 = scalar_select %p35, 0, %s34
      %s37 = sadd.s32 %s24, %s25
      %p38 = scmp.lt.s32.totalorder %s37, 0
      %s39 = scalar_select %p38, %s37, 0
      %s40 = sadd.s32 %s36, %s32
      %p41 = scmp.lt.s32.totalorder %s40, 0
      %s42 = scalar_select %p41, %s40, 0
      %s43 = ssub.s32 %s39, %s42
      %p44 = scmp.eq.s32.totalorder %s43, 0
      %s46 = sadd.s32 %s45, 1
      %s47 = scalar_select %p44, %s45, %s46
      %p50 = pneg %p44
      %p51 = scmp.eq.s32.totalorder %s17, 1
      %p52 = por %p50, %p51
      %p53 = scmp.ne.s32.totalorder %s45, %s48
      %p54 = scmp.eq.s32.totalorder %s17, 0
      %p55 = por %p53, %p54
      %p56 = scmp.ne.s32.totalorder %s45, %s48
      %p57 = scmp.eq.s32.totalorder %s22, 1
      %p58 = por %p56, %p57
      %p59 = scmp.ne.s32.totalorder %s48, %s49
      %p60 = scmp.eq.s32.totalorder %s22, 0
      %p61 = por %p59, %p60
      %p62 = scmp.ne.s32.totalorder %s48, %s49
      %p63 = scmp.eq.s32.totalorder %s23, 1
      %p64 = por %p62, %p63
      %p66 = scmp.ne.s32.totalorder %s49, %s65
      %p67 = scmp.eq.s32.totalorder %s23, 0
      %p68 = por %p66, %p67
      %s69 = sadd.s32 %s24, %s25
      %p70 = scmp.lt.s32.totalorder %s69, 0
      %s71 = scalar_select %p70, %s69, 0
      %s72 = sadd.s32 %s36, %s32
      %p73 = scmp.lt.s32.totalorder %s72, 0
      %s74 = scalar_select %p73, %s72, 0
      %s75 = ssub.s32 %s71, %s74
      %p76 = scmp.eq.s32.totalorder %s75, 0
      %s78 = sadd.s32 %s77, 1
      %s79 = scalar_select %p76, %s77, %s78
      %p82 = pneg %p76
      %p83 = scmp.eq.s32.totalorder %s17, 1
      %p84 = por %p82, %p83
      %p85 = scmp.ne.s32.totalorder %s77, %s80
      %p86 = scmp.eq.s32.totalorder %s17, 0
      %p87 = por %p85, %p86
      %p88 = scmp.ne.s32.totalorder %s77, %s80
      %p89 = scmp.eq.s32.totalorder %s22, 1
      %p90 = por %p88, %p89
      %p91 = scmp.ne.s32.totalorder %s80, %s81
      %p92 = scmp.eq.s32.totalorder %s22, 0
      %p93 = por %p91, %p92
      %p94 = scmp.ne.s32.totalorder %s80, %s81
      %p95 = scmp.eq.s32.totalorder %s23, 1
      %p96 = por %p94, %p95
      %p98 = scmp.ne.s32.totalorder %s81, %s97
      %p99 = scmp.eq.s32.totalorder %s23, 0
      %p100 = por %p98, %p99
      %s101 = ssub.s32 %s24, %s36
      %p102 = scmp.eq.s32.totalorder %s101, 0
      %s104 = sadd.s32 %s103, 1
      %s105 = scalar_select %p102, %s103, %s104
      %p108 = pneg %p102
      %p109 = scmp.eq.s32.totalorder %s17, 1
      %p110 = por %p108, %p109
      %p111 = scmp.ne.s32.totalorder %s103, %s106
      %p112 = scmp.eq.s32.totalorder %s17, 0
      %p113 = por %p111, %p112
      %p114 = scmp.ne.s32.totalorder %s103, %s106
      %p115 = scmp.eq.s32.totalorder %s22, 1
      %p116 = por %p114, %p115
      %p117 = scmp.ne.s32.totalorder %s106, %s107
      %p118 = scmp.eq.s32.totalorder %s22, 0
      %p119 = por %p117, %p118
      %p120 = scmp.ne.s32.totalorder %s106, %s107
      %p121 = scmp.eq.s32.totalorder %s23, 1
      %p122 = por %p120, %p121
      %p124 = scmp.ne.s32.totalorder %s107, %s123
      %p125 = scmp.eq.s32.totalorder %s23, 0
      %p126 = por %p124, %p125
      %p127 = scmp.le.s32.totalorder 1, %s17
      %p128 = scmp.lt.s32.totalorder %s17, 3
      %p129 = pnand %p127, %p128
      %p130 = pneg %p129
      // Predicated region
      $region9: #{tpu_custom_call.1} parent=5 // pred_check
        _
      $region10: #{tpu_custom_call.1} parent=5 // pred_check_branch
        %132 = sbr.rel (%p129) target = $region12
      $region11: #{tpu_custom_call.1} parent=5 // pred_region
        %s133 = ssub.s32 %s17, 1
      $region12: #{tpu_custom_call.1} parent=5 // pred_fallthru
        _
      %p134 = scmp.lt.s32.totalorder %s17, 2
      // Predicated region
      $region13: #{tpu_custom_call.1} parent=5 // pred_check
        %p135 = pneg %p134
      $region14: #{tpu_custom_call.1} parent=5 // pred_check_branch
        %137 = sbr.rel (%p135) target = $region16
      $region15: #{tpu_custom_call.1} parent=5 // pred_region
        // Predicated region
        $region17: #{tpu_custom_call.1} parent=15 // pred_check
          %p138 = pneg %p55
        $region18: #{tpu_custom_call.1} parent=15 // pred_check_branch
          %140 = sbr.rel (%p138) target = $region20
        $region19: #{tpu_custom_call.1} parent=15 // pred_region
          %s141 = sand.u32 %s45, 1
          %s142 = scalar_lea.sflag [#allocation4], %s141
          %s143 = sand.u32 %s45, 1
          %s144 = smul.addr %s143, 16
          %s145 = scalar_lea.vmem [#allocation3], %s144
          %s146 = sadd.s32 %s24, %s25
          %p147 = scmp.lt.s32.totalorder %s146, 0
          %s148 = scalar_select %p147, %s146, 0
          %s149 = smul.u32 2, %s148
          %s151 = ssub.s32 256, 256
          %152 = vsyncadd %s142, %s151
          %s153 = smul.addr %s149, 128
          %s154 = scalar_lea.hbm %s0, %s153
          %s155 = sshll.u32 %s145, 4
          %s156 = int_to_ptr.vmem [resolvable:$true] %s155
          %161 = dma.hbm_to_vmem [thread:$0]  %s154, 256, %s156, %s142, 128, 128, 8
        $region20: #{tpu_custom_call.1} parent=15 // pred_fallthru
          _
        // Predicated region
        $region21: #{tpu_custom_call.1} parent=15 // pred_check
          %p162 = pneg %p87
        $region22: #{tpu_custom_call.1} parent=15 // pred_check_branch
          %164 = sbr.rel (%p162) target = $region24
        $region23: #{tpu_custom_call.1} parent=15 // pred_region
          %s165 = sand.u32 %s77, 1
          %s166 = scalar_lea.sflag [#allocation7], %s165
          %s167 = sand.u32 %s77, 1
          %s168 = smul.addr %s167, 16
          %s169 = scalar_lea.vmem [#allocation6], %s168
          %s170 = sadd.s32 %s24, %s25
          %p171 = scmp.lt.s32.totalorder %s170, 0
          %s172 = scalar_select %p171, %s170, 0
          %s173 = smul.u32 2, %s172
          %s175 = ssub.s32 256, 256
          %176 = vsyncadd %s166, %s175
          %s177 = smul.addr %s173, 128
          %s178 = scalar_lea.hbm %s1, %s177
          %s179 = sshll.u32 %s169, 4
          %s180 = int_to_ptr.vmem [resolvable:$true] %s179
          %185 = dma.hbm_to_vmem [thread:$0]  %s178, 256, %s180, %s166, 128, 128, 8
        $region24: #{tpu_custom_call.1} parent=15 // pred_fallthru
          _
      $region16: #{tpu_custom_call.1} parent=5 // pred_fallthru
        _
      %p186 = scmp.le.s32.totalorder 1, %s17
      %p187 = scmp.lt.s32.totalorder %s17, 3
      %p188 = pnand %p186, %p187
      %p189 = pneg %p188
      // Predicated region
      $region25: #{tpu_custom_call.1} parent=5 // pred_check
        _
      $region26: #{tpu_custom_call.1} parent=5 // pred_check_branch
        %191 = sbr.rel (%p188) target = $region28
      $region27: #{tpu_custom_call.1} parent=5 // pred_region
        %s192 = ssub.s32 %s17, 1
        %s193 = sand.u32 %s48, 1
        %s194 = scalar_lea.sflag [#allocation4], %s193
        %s195 = sand.u32 %s48, 1
        %s196 = smul.addr %s195, 16
        %s197 = scalar_lea.vmem [#allocation3], %s196
        // Predicated region
        $region29: #{tpu_custom_call.1} parent=27 // pred_check
          %p198 = pneg %p61
        $region30: #{tpu_custom_call.1} parent=27 // pred_check_branch
          %200 = sbr.rel (%p198) target = $region32
        $region31: #{tpu_custom_call.1} parent=27 // pred_region
          %201 = dma.done %s194, 256
        $region32: #{tpu_custom_call.1} parent=27 // pred_fallthru
          _
        %s202 = sand.u32 %s80, 1
        %s203 = scalar_lea.sflag [#allocation7], %s202
        %s204 = sand.u32 %s80, 1
        %s205 = smul.addr %s204, 16
        %s206 = scalar_lea.vmem [#allocation6], %s205
        // Predicated region
        $region33: #{tpu_custom_call.1} parent=27 // pred_check
          %p207 = pneg %p93
        $region34: #{tpu_custom_call.1} parent=27 // pred_check_branch
          %209 = sbr.rel (%p207) target = $region36
        $region35: #{tpu_custom_call.1} parent=27 // pred_region
          %210 = dma.done %s203, 256
        $region36: #{tpu_custom_call.1} parent=27 // pred_fallthru
          _
        %s211 = sand.u32 %s48, 1
        %s212 = scalar_lea.sflag [#allocation4], %s211
        %s213 = sand.u32 %s48, 1
        %s214 = smul.addr %s213, 16
        %s215 = scalar_lea.vmem [#allocation3], %s214
        %p216 = pneg %p61
        %p217 = pneg %p58
        %s218 = sand.u32 %s80, 1
        %s219 = scalar_lea.sflag [#allocation7], %s218
        %s220 = sand.u32 %s80, 1
        %s221 = smul.addr %s220, 16
        %s222 = scalar_lea.vmem [#allocation6], %s221
        %p223 = pneg %p93
        %p224 = pneg %p90
        %p225 = pneg %p119
        %p226 = pneg %p116
        %s227 = sand.u32 %s106, 1
        %s228 = scalar_lea.sflag [#allocation5], %s227
        %s229 = sand.u32 %s106, 1
        %s230 = smul.addr %s229, 8
        %s231 = scalar_lea.vmem [#allocation8], %s230
        %s232 = sadd.s32 %s26, %s27
        %p233 = scmp.lt.s32.totalorder %s232, 0
        %s234 = scalar_select %p233, %s232, 0
        %s235 = smul.u32 2, %s234
        %s236 = sadd.s32 %s26, %s27
        %p237 = scmp.lt.s32.totalorder %s236, 0
        %s238 = scalar_select %p237, %s236, 0
        %s239 = smul.u32 2, %s238
        %s240 = sadd.s32 %s26, %s27
        %p241 = scmp.eq.s32.totalorder %s27, 0
        // Predicated region
        $region37: #{tpu_custom_call.1} parent=27 // pred_check
          %p242 = pneg %p241
        $region38: #{tpu_custom_call.1} parent=27 // pred_check_branch
          %244 = sbr.rel (%p242) target = $region40
        $region39: #{tpu_custom_call.1} parent=27 // pred_region
          %245 = vst [vmem:[#allocation2] sm:$0xff] 0.0
        $region40: #{tpu_custom_call.1} parent=27 // pred_fallthru
          _
        %v246 = vld [vmem:[%s197] sm:$0xff]
        %v247 = vld [vmem:[%s197 + $0x8] sm:$0xff]
        %v248 = vld [vmem:[%s206] sm:$0xff]
        %v249 = vld [vmem:[%s206 + $0x8] sm:$0xff]
        %v250 = vsub.f32 %v246, %v248
        %v251 = vsub.f32 %v247, %v249
        %v252 = vand.u32 2147483647, %v250
        %v253 = vand.u32 2147483647, %v251
        %v254 = vmul.f32 %v252, 19.085537
        %v255 = vmul.f32 %v253, 19.085537
        %v256 = vadd.f32 %v254, 1.0
        %v257 = vadd.f32 %v255, 1.0
        %v258 = vmul.f32 %v256, 0.026197849
        %v259 = vmul.f32 %v257, 0.026197849
        %v260 = vadd.f32 %v254, 1.0
        %v261 = vlog2.pop %v260
        %v262 = vmul.f32 %v261, 0.6931472
        %v263 = vmul.f32 -0.5, %v254
        %v264 = vadd.f32 %v263, 1.0
        %v265 = vmul.f32 %v264, %v254
        %v266 = vand.u32 2147483647, %v254
        %vm267 = vcmp.lt.f32.partialorder %v266, 0.0004427343
        %v268 = vsel %vm267, %v265, %v262
        %v269 = vadd.f32 %v255, 1.0
        %v270 = vlog2.pop %v269
        %v271 = vmul.f32 %v270, 0.6931472
        %v272 = vmul.f32 -0.5, %v255
        %v273 = vadd.f32 %v272, 1.0
        %v274 = vmul.f32 %v273, %v255
        %v275 = vand.u32 2147483647, %v255
        %vm276 = vcmp.lt.f32.partialorder %v275, 0.0004427343
        %v277 = vsel %vm276, %v274, %v271
        %v278 = vmul.f32 %v258, %v268
        %v279 = vmul.f32 %v259, %v277
        %v280 = vmul.f32 %v252, 0.5
        %v281 = vmul.f32 %v253, 0.5
        %v282 = vsub.f32 %v278, %v280
        %v283 = vsub.f32 %v279, %v281
        %v284 = vmul.f32 %v252, 1.5
        %v285 = vmul.f32 %v253, 1.5
        %v286 = vadd.f32 %v284, -0.42140645
        %v287 = vadd.f32 %v285, -0.42140645
        %vm288 = vcmp.lt.f32.partialorder %v252, 1.0
        %vm289 = vcmp.lt.f32.partialorder %v253, 1.0
        %v290 = vsel %vm288, %v282, %v286
        %v291 = vsel %vm289, %v283, %v287
        %p292 = scmp.lt.s32.totalorder %s240, 1
        // Predicated region
        $region41: #{tpu_custom_call.1} parent=27 // pred_check
          %p293 = pneg %p292
        $region42: #{tpu_custom_call.1} parent=27 // pred_check_branch
          %295 = sbr.rel (%p293) target = $region44
        $region43: #{tpu_custom_call.1} parent=27 // pred_region
          %v296 = vld [vmem:[#allocation2] sm:$0xff]
          %v297 = vadd.f32 %v290, %v291
          %v298 = vadd.f32 %v296, %v297
          %299 = vst [vmem:[#allocation2] sm:$0xff] %v298
        $region44: #{tpu_custom_call.1} parent=27 // pred_fallthru
          _
        %p300 = scmp.ge.s32.totalorder %s240, 1
        // Predicated region
        $region45: #{tpu_custom_call.1} parent=27 // pred_check
          %p301 = pneg %p300
        $region46: #{tpu_custom_call.1} parent=27 // pred_check_branch
          %303 = sbr.rel (%p301) target = $region48
        $region47: #{tpu_custom_call.1} parent=27 // pred_region
          %v304 = vlaneseq
          %v305 = vshrl.u32 %v304, 7
          %v306 = vadd.s32 %v305, 8
          %v307 = vlaneseq
          %v308 = vand.u32 %v307, 127
          %s309 = smul.u32 %s240, 2048
          %v310 = vmul.u32 %v305, 128
          %v311 = vmul.u32 %v306, 128
          %v312 = vstv %s309
          %v313 = vadd.s32 %v312, %v310
          %v314 = vadd.s32 %v312, %v311
          %v315 = vadd.s32 %v313, %v308
          %v316 = vadd.s32 %v314, %v308
          %vm317 = vcmp.lt.s32.totalorder %v315, 2048
          %vm318 = vcmp.lt.s32.totalorder %v316, 2048
          %v319 = vsel %vm317, %v290, 0.0
          %v320 = vsel %vm318, %v291, 0.0
          %v321 = vld [vmem:[#allocation2] sm:$0xff]
          %v322 = vadd.f32 %v319, %v320
          %v323 = vadd.f32 %v321, %v322
          %324 = vst [vmem:[#allocation2] sm:$0xff] %v323
        $region48: #{tpu_custom_call.1} parent=27 // pred_fallthru
          _
        // Predicated region
        $region49: #{tpu_custom_call.1} parent=27 // pred_check
          %p325 = pneg %p241
        $region50: #{tpu_custom_call.1} parent=27 // pred_check_branch
          %327 = sbr.rel (%p325) target = $region52
        $region51: #{tpu_custom_call.1} parent=27 // pred_region
          %v328 = vld [vmem:[#allocation2] sm:$0xff]
          %329 = vst [vmem:[%s231] sm:$0xff] %v328
        $region52: #{tpu_custom_call.1} parent=27 // pred_fallthru
          _
        %s330 = sand.u32 %s106, 1
        %s331 = scalar_lea.sflag [#allocation5], %s330
        %s332 = sand.u32 %s106, 1
        %s333 = smul.addr %s332, 8
        %s334 = scalar_lea.vmem [#allocation8], %s333
        // Predicated region
        $region53: #{tpu_custom_call.1} parent=27 // pred_check
          %p335 = pneg %p116
        $region54: #{tpu_custom_call.1} parent=27 // pred_check_branch
          %337 = sbr.rel (%p335) target = $region56
        $region55: #{tpu_custom_call.1} parent=27 // pred_region
          %s339 = ssub.s32 128, 128
          %340 = vsyncadd %s331, %s339
          %s341 = smul.addr %s26, 128
          %s342 = scalar_lea.hbm %s2, %s341
          %s344 = sshll.u32 %s334, 4
          %s345 = int_to_ptr.vmem [resolvable:$true] %s344
          %347 = dma.vmem_to_hbm [thread:$0]  %s345, 128, %s342, %s331
        $region56: #{tpu_custom_call.1} parent=27 // pred_fallthru
          _
      $region28: #{tpu_custom_call.1} parent=5 // pred_fallthru
        _
      %p348 = scmp.le.s32.totalorder 2, %s17
      // Predicated region
      $region57: #{tpu_custom_call.1} parent=5 // pred_check
        %p349 = pneg %p348
      $region58: #{tpu_custom_call.1} parent=5 // pred_check_branch
        %351 = sbr.rel (%p349) target = $region60
      $region59: #{tpu_custom_call.1} parent=5 // pred_region
        %s352 = ssub.s32 %s17, 2
        // Predicated region
        $region61: #{tpu_custom_call.1} parent=59 // pred_check
          %p353 = pneg %p122
        $region62: #{tpu_custom_call.1} parent=59 // pred_check_branch
          %355 = sbr.rel (%p353) target = $region64
        $region63: #{tpu_custom_call.1} parent=59 // pred_region
          %s356 = sand.u32 %s107, 1
          %s357 = scalar_lea.sflag [#allocation5], %s356
          %s358 = sand.u32 %s107, 1
          %s359 = smul.addr %s358, 8
          %s360 = scalar_lea.vmem [#allocation8], %s359
          %361 = dma.done %s357, 128
        $region64: #{tpu_custom_call.1} parent=59 // pred_fallthru
          _
      $region60: #{tpu_custom_call.1} parent=5 // pred_fallthru
        _
    $region6: #{tpu_custom_call.1} parent=1 // loop_footer
      %s21 = sadd.s32 1, %s17
    $region7: #{tpu_custom_call.1} parent=1 // loop_footer_branch
      %16 = sbr.rel target = $region3
    $region8: #{tpu_custom_call.1} parent=1 // loop_exit
      _
    %362 = vsyncpa [#allocation4], 1
    %s363 = scalar_lea.sflag [#allocation4], 1
    %364 = vsyncpa %s363, 1
    %365 = vsyncpa [#allocation7], 1
    %s366 = scalar_lea.sflag [#allocation7], 1
    %367 = vsyncpa %s366, 1
    %368 = vsyncpa [#allocation5], 1
    %s369 = scalar_lea.sflag [#allocation5], 1
    %370 = vsyncpa %s369, 1

</llo_original>
